<compile_context>
chip_gen: v5e
topology: v5e:2x2
jax: 0.10.0
libtpu: 0.0.40
codegen_flags: <defaults>
</compile_context>

<pallas_src>
import functools

import jax
import jax.numpy as jnp
from jax.experimental import pallas as pl
from jax.experimental.pallas import tpu as pltpu

BN_EPS = 1e-5
LANES = 128


def _round_up(n, m):
    return ((n + m - 1) // m) * m


def _bn(h, gamma, beta, inv_b, relu):
    """BatchNorm1d with batch statistics (biased var), fused single-pass stats."""
    s1 = jnp.sum(h, axis=0, keepdims=True)
    s2 = jnp.sum(h * h, axis=0, keepdims=True)
    mean = s1 * inv_b
    var = jnp.maximum(s2 * inv_b - mean * mean, 0.0)
    h = (h - mean) * jax.lax.rsqrt(var + BN_EPS)     # rsqrt -> EUP
    h = h * gamma + beta
    if relu:
        h = jnp.maximum(h, 0.0)
    return h


def nn2_kernel(x_ref, slab_ref, o_ref, *, d_in, o_w2, o_w3, o_gb, inv_b):
    x = x_ref[...].astype(jnp.float32)                 # x.float()

    # Static views into the packed parameter slab (all lane-width 128).
    w1 = slab_ref[0:d_in, :]                           # (d_in, 128); cols >= d_hid are 0
    w2 = slab_ref[o_w2:o_w2 + LANES, :]                # (128, 128); rows >= d_hid are 0
    w3 = slab_ref[o_w3:o_w3 + LANES, :]                # (128, 128); rows >= d_hid are 0
    gb = slab_ref[o_gb:o_gb + 8, :]                    # rows: g1, be1, g2, be2, g3, be3, pad, pad

    h = _bn(jnp.dot(x, w1, preferred_element_type=jnp.float32),
            gb[0:1], gb[1:2], inv_b, relu=True)
    h = _bn(jnp.dot(h, w2, preferred_element_type=jnp.float32),
            gb[2:3], gb[3:4], inv_b, relu=True)
    h = _bn(jnp.dot(h, w3, preferred_element_type=jnp.float32),
            gb[4:5], gb[5:6], inv_b, relu=False)

    o_ref[...] = h.astype(o_ref.dtype)                 # lane-dense (B, 128) store


def pack_params(params, d_in, d_hid, d_out):
    """Pack weights + gamma/beta into one lane-padded (rows, 128) f32 slab.

    Linear biases are intentionally omitted: they are cancelled by the
    batch-stats mean subtraction of the following BatchNorm.
    Padded rows/lanes are zero, so padded activation columns stay exactly 0
    through matmul + BN (gamma/beta padding is 0) and are sliced off by the
    wrapper.
    """
    (w1, _b1, g1, be1, w2, _b2, g2, be2, w3, _b3, g3, be3) = params
    o_w2 = _round_up(d_in, 8)
    o_w3 = o_w2 + LANES
    o_gb = o_w3 + LANES
    n_rows = o_gb + 8

    slab = jnp.zeros((n_rows, LANES), jnp.float32)
    slab = slab.at[0:d_in, 0:d_hid].set(w1)
    slab = slab.at[o_w2:o_w2 + d_hid, 0:d_hid].set(w2)
    slab = slab.at[o_w3:o_w3 + d_hid, 0:d_out].set(w3)
    slab = slab.at[o_gb + 0, 0:d_hid].set(g1[0])
    slab = slab.at[o_gb + 1, 0:d_hid].set(be1[0])
    slab = slab.at[o_gb + 2, 0:d_hid].set(g2[0])
    slab = slab.at[o_gb + 3, 0:d_hid].set(be2[0])
    slab = slab.at[o_gb + 4, 0:d_out].set(g3[0])
    slab = slab.at[o_gb + 5, 0:d_out].set(be3[0])
    return slab, (o_w2, o_w3, o_gb)


def nn2_forward(x, slab, offsets, d_out):
    """x: (B, 2*Ngk + n_features) -> (B, Ngk) float32.

    NOTE: BatchNorm uses statistics over the whole batch, so the full batch
    must stay inside one kernel invocation (no batch-axis grid) unless a
    two-pass stats scheme is added.
    """
    B, d_in = x.shape
    o_w2, o_w3, o_gb = offsets
    kernel = functools.partial(nn2_kernel, d_in=d_in, o_w2=o_w2, o_w3=o_w3,
                               o_gb=o_gb, inv_b=1.0 / B)
    out_pad = pl.pallas_call(
        kernel,
        out_shape=jax.ShapeDtypeStruct((B, LANES), jnp.float32),
        in_specs=[pl.BlockSpec(memory_space=pltpu.MemorySpace.VMEM)] * 2,
        out_specs=pl.BlockSpec(memory_space=pltpu.MemorySpace.VMEM),
    )(x, slab)
    return out_pad[:, :d_out]


def init_params(key, n_features, Np, N_grid):
    """Deterministic init mirroring PyTorch default shapes.
    Linear weights stored transposed as (in, out) for x @ w. Biases are
    generated (to mirror the PyTorch module) but never used by the kernel."""
    Ngk = N_grid // Np
    Nc = (n_features - 1) // 2
    d_in = 2 * Ngk + n_features
    d_hid = 2 * Nc + Ngk
    d_out = Ngk

    def linear(key, fan_in, fan_out):
        kw, kb = jax.random.split(key)
        bound = 1.0 / jnp.sqrt(fan_in)
        w = jax.random.uniform(kw, (fan_in, fan_out), jnp.float32, -bound, bound)
        b = jax.random.uniform(kb, (1, fan_out), jnp.float32, -bound, bound)
        return w, b

    k1, k2, k3 = jax.random.split(key, 3)
    w1, b1 = linear(k1, d_in, d_hid)
    w2, b2 = linear(k2, d_hid, d_hid)
    w3, b3 = linear(k3, d_hid, d_out)
    g1, be1 = jnp.ones((1, d_hid), jnp.float32), jnp.zeros((1, d_hid), jnp.float32)
    g2, be2 = jnp.ones((1, d_hid), jnp.float32), jnp.zeros((1, d_hid), jnp.float32)
    g3, be3 = jnp.ones((1, d_out), jnp.float32), jnp.zeros((1, d_out), jnp.float32)
    return (w1, b1, g1, be1, w2, b2, g2, be2, w3, b3, g3, be3)


def nn2_reference(x, params):
    """Pure-JAX reference matching the PyTorch forward (includes the biases)."""
    (w1, b1, g1, be1, w2, b2, g2, be2, w3, b3, g3, be3) = params

    def lbn(h, w, b, g, be, relu):
        h = h @ w + b
        mean = jnp.mean(h, axis=0, keepdims=True)
        var = jnp.mean((h - mean) ** 2, axis=0, keepdims=True)
        h = (h - mean) / jnp.sqrt(var + BN_EPS) * g + be
        return jnp.maximum(h, 0.0) if relu else h

    h = lbn(x.astype(jnp.float32), w1, b1, g1, be1, True)
    h = lbn(h, w2, b2, g2, be2, True)
    return lbn(h, w3, b3, g3, be3, False)


if __name__ == "__main__":
    # n_features=9 -> Nc=4 ; Np=2, N_grid=16 -> Ngk=8
    # d_in = 2*Ngk + n_features = 25 ; d_hid = 2*Nc + Ngk = 16 ; d_out = Ngk = 8
    n_features, Np, N_grid = 9, 2, 16
    Ngk = N_grid // Np
    Nc = (n_features - 1) // 2
    d_in, d_hid, d_out = 2 * Ngk + n_features, 2 * Nc + Ngk, Ngk
    B = 8

    key = jax.random.PRNGKey(0)
    k_x, k_p = jax.random.split(key)
    x = jax.random.normal(k_x, (B, d_in), jnp.float32)
    params = init_params(k_p, n_features, Np, N_grid)
    slab, offsets = pack_params(params, d_in, d_hid, d_out)

    out = nn2_forward(x, slab, offsets, d_out)
    jax.block_until_ready(out)
    assert out.shape == (B, d_out) and out.dtype == jnp.float32

    ref = nn2_reference(x, params)
    assert jnp.allclose(out, ref, atol=1e-3, rtol=1e-3), \
        float(jnp.max(jnp.abs(out - ref)))
    print("KERNEL_OK")
</pallas_src>

<mosaic_0001>
module attributes {stable_mosaic.version = 11 : i64} {
  func.func @nn2_kernel(%arg0: memref<8x25xf32, #tpu.memory_space<vmem>>, %arg1: memref<296x128xf32, #tpu.memory_space<vmem>>, %arg2: memref<8x128xf32, #tpu.memory_space<vmem>>) attributes {dimension_semantics = [], scalar_prefetch = 0 : i64, scratch_operands = 0 : i64, tpu.core_type = #tpu.core_type<tc>} {
    %c0 = arith.constant 0 : index
    %c0_0 = arith.constant 0 : index
    %0 = vector.load %arg0[%c0, %c0_0] : memref<8x25xf32, #tpu.memory_space<vmem>>, vector<8x25xf32>
    %c0_1 = arith.constant 0 : index
    %c0_2 = arith.constant 0 : index
    %1 = vector.load %arg1[%c0_1, %c0_2] : memref<296x128xf32, #tpu.memory_space<vmem>>, vector<25x128xf32>
    %c32 = arith.constant 32 : index
    %c0_3 = arith.constant 0 : index
    %2 = vector.load %arg1[%c32, %c0_3] : memref<296x128xf32, #tpu.memory_space<vmem>>, vector<128x128xf32>
    %c160 = arith.constant 160 : index
    %c0_4 = arith.constant 0 : index
    %3 = vector.load %arg1[%c160, %c0_4] : memref<296x128xf32, #tpu.memory_space<vmem>>, vector<128x128xf32>
    %c288 = arith.constant 288 : index
    %c0_5 = arith.constant 0 : index
    %4 = vector.load %arg1[%c288, %c0_5] : memref<296x128xf32, #tpu.memory_space<vmem>>, vector<8x128xf32>
    %cst = arith.constant dense<0.000000e+00> : vector<8x128xf32>
    %5 = tpu.matmul %0, %1, %cst {dimension_numbers = #tpu.dot_dimension_numbers<[1], [0], [0], [1], [0, 0, 1, 1], [], []>} : vector<8x25xf32>, vector<25x128xf32>, vector<8x128xf32> -> vector<8x128xf32>
    %6 = vector.extract_strided_slice %4 {offsets = [0, 0], sizes = [1, 128], strides = [1, 1]} : vector<8x128xf32> to vector<1x128xf32>
    %7 = vector.extract_strided_slice %4 {offsets = [1, 0], sizes = [1, 128], strides = [1, 1]} : vector<8x128xf32> to vector<1x128xf32>
    %cst_6 = arith.constant dense<0.000000e+00> : vector<128xf32>
    %8 = vector.multi_reduction <add>, %5, %cst_6 [0] : vector<8x128xf32> to vector<128xf32>
    %9 = vector.shape_cast %8 : vector<128xf32> to vector<1x128xf32>
    %10 = arith.mulf %5, %5 : vector<8x128xf32>
    %cst_7 = arith.constant dense<0.000000e+00> : vector<128xf32>
    %11 = vector.multi_reduction <add>, %10, %cst_7 [0] : vector<8x128xf32> to vector<128xf32>
    %12 = vector.shape_cast %11 : vector<128xf32> to vector<1x128xf32>
    %cst_8 = arith.constant 1.250000e-01 : f32
    %13 = vector.broadcast %cst_8 : f32 to vector<1x128xf32>
    %14 = arith.mulf %9, %13 : vector<1x128xf32>
    %cst_9 = arith.constant 1.250000e-01 : f32
    %15 = vector.broadcast %cst_9 : f32 to vector<1x128xf32>
    %16 = arith.mulf %12, %15 : vector<1x128xf32>
    %17 = arith.mulf %14, %14 : vector<1x128xf32>
    %18 = arith.subf %16, %17 : vector<1x128xf32>
    %cst_10 = arith.constant 0.000000e+00 : f32
    %19 = vector.broadcast %cst_10 : f32 to vector<1x128xf32>
    %20 = arith.maximumf %18, %19 : vector<1x128xf32>
    %21 = vector.broadcast %14 : vector<1x128xf32> to vector<8x128xf32>
    %22 = arith.subf %5, %21 : vector<8x128xf32>
    %cst_11 = arith.constant 9.99999974E-6 : f32
    %23 = vector.broadcast %cst_11 : f32 to vector<1x128xf32>
    %24 = arith.addf %20, %23 : vector<1x128xf32>
    %25 = math.rsqrt %24 : vector<1x128xf32>
    %26 = vector.broadcast %25 : vector<1x128xf32> to vector<8x128xf32>
    %27 = arith.mulf %22, %26 : vector<8x128xf32>
    %28 = vector.broadcast %6 : vector<1x128xf32> to vector<8x128xf32>
    %29 = arith.mulf %27, %28 : vector<8x128xf32>
    %30 = vector.broadcast %7 : vector<1x128xf32> to vector<8x128xf32>
    %31 = arith.addf %29, %30 : vector<8x128xf32>
    %cst_12 = arith.constant 0.000000e+00 : f32
    %32 = vector.broadcast %cst_12 : f32 to vector<8x128xf32>
    %33 = arith.maximumf %31, %32 : vector<8x128xf32>
    %cst_13 = arith.constant dense<0.000000e+00> : vector<8x128xf32>
    %34 = tpu.matmul %33, %2, %cst_13 {dimension_numbers = #tpu.dot_dimension_numbers<[1], [0], [0], [1], [0, 0, 1, 1], [], []>} : vector<8x128xf32>, vector<128x128xf32>, vector<8x128xf32> -> vector<8x128xf32>
    %35 = vector.extract_strided_slice %4 {offsets = [2, 0], sizes = [1, 128], strides = [1, 1]} : vector<8x128xf32> to vector<1x128xf32>
    %36 = vector.extract_strided_slice %4 {offsets = [3, 0], sizes = [1, 128], strides = [1, 1]} : vector<8x128xf32> to vector<1x128xf32>
    %cst_14 = arith.constant dense<0.000000e+00> : vector<128xf32>
    %37 = vector.multi_reduction <add>, %34, %cst_14 [0] : vector<8x128xf32> to vector<128xf32>
    %38 = vector.shape_cast %37 : vector<128xf32> to vector<1x128xf32>
    %39 = arith.mulf %34, %34 : vector<8x128xf32>
    %cst_15 = arith.constant dense<0.000000e+00> : vector<128xf32>
    %40 = vector.multi_reduction <add>, %39, %cst_15 [0] : vector<8x128xf32> to vector<128xf32>
    %41 = vector.shape_cast %40 : vector<128xf32> to vector<1x128xf32>
    %cst_16 = arith.constant 1.250000e-01 : f32
    %42 = vector.broadcast %cst_16 : f32 to vector<1x128xf32>
    %43 = arith.mulf %38, %42 : vector<1x128xf32>
    %cst_17 = arith.constant 1.250000e-01 : f32
    %44 = vector.broadcast %cst_17 : f32 to vector<1x128xf32>
    %45 = arith.mulf %41, %44 : vector<1x128xf32>
    %46 = arith.mulf %43, %43 : vector<1x128xf32>
    %47 = arith.subf %45, %46 : vector<1x128xf32>
    %cst_18 = arith.constant 0.000000e+00 : f32
    %48 = vector.broadcast %cst_18 : f32 to vector<1x128xf32>
    %49 = arith.maximumf %47, %48 : vector<1x128xf32>
    %50 = vector.broadcast %43 : vector<1x128xf32> to vector<8x128xf32>
    %51 = arith.subf %34, %50 : vector<8x128xf32>
    %cst_19 = arith.constant 9.99999974E-6 : f32
    %52 = vector.broadcast %cst_19 : f32 to vector<1x128xf32>
    %53 = arith.addf %49, %52 : vector<1x128xf32>
    %54 = math.rsqrt %53 : vector<1x128xf32>
    %55 = vector.broadcast %54 : vector<1x128xf32> to vector<8x128xf32>
    %56 = arith.mulf %51, %55 : vector<8x128xf32>
    %57 = vector.broadcast %35 : vector<1x128xf32> to vector<8x128xf32>
    %58 = arith.mulf %56, %57 : vector<8x128xf32>
    %59 = vector.broadcast %36 : vector<1x128xf32> to vector<8x128xf32>
    %60 = arith.addf %58, %59 : vector<8x128xf32>
    %cst_20 = arith.constant 0.000000e+00 : f32
    %61 = vector.broadcast %cst_20 : f32 to vector<8x128xf32>
    %62 = arith.maximumf %60, %61 : vector<8x128xf32>
    %cst_21 = arith.constant dense<0.000000e+00> : vector<8x128xf32>
    %63 = tpu.matmul %62, %3, %cst_21 {dimension_numbers = #tpu.dot_dimension_numbers<[1], [0], [0], [1], [0, 0, 1, 1], [], []>} : vector<8x128xf32>, vector<128x128xf32>, vector<8x128xf32> -> vector<8x128xf32>
    %64 = vector.extract_strided_slice %4 {offsets = [4, 0], sizes = [1, 128], strides = [1, 1]} : vector<8x128xf32> to vector<1x128xf32>
    %65 = vector.extract_strided_slice %4 {offsets = [5, 0], sizes = [1, 128], strides = [1, 1]} : vector<8x128xf32> to vector<1x128xf32>
    %cst_22 = arith.constant dense<0.000000e+00> : vector<128xf32>
    %66 = vector.multi_reduction <add>, %63, %cst_22 [0] : vector<8x128xf32> to vector<128xf32>
    %67 = vector.shape_cast %66 : vector<128xf32> to vector<1x128xf32>
    %68 = arith.mulf %63, %63 : vector<8x128xf32>
    %cst_23 = arith.constant dense<0.000000e+00> : vector<128xf32>
    %69 = vector.multi_reduction <add>, %68, %cst_23 [0] : vector<8x128xf32> to vector<128xf32>
    %70 = vector.shape_cast %69 : vector<128xf32> to vector<1x128xf32>
    %cst_24 = arith.constant 1.250000e-01 : f32
    %71 = vector.broadcast %cst_24 : f32 to vector<1x128xf32>
    %72 = arith.mulf %67, %71 : vector<1x128xf32>
    %cst_25 = arith.constant 1.250000e-01 : f32
    %73 = vector.broadcast %cst_25 : f32 to vector<1x128xf32>
    %74 = arith.mulf %70, %73 : vector<1x128xf32>
    %75 = arith.mulf %72, %72 : vector<1x128xf32>
    %76 = arith.subf %74, %75 : vector<1x128xf32>
    %cst_26 = arith.constant 0.000000e+00 : f32
    %77 = vector.broadcast %cst_26 : f32 to vector<1x128xf32>
    %78 = arith.maximumf %76, %77 : vector<1x128xf32>
    %79 = vector.broadcast %72 : vector<1x128xf32> to vector<8x128xf32>
    %80 = arith.subf %63, %79 : vector<8x128xf32>
    %cst_27 = arith.constant 9.99999974E-6 : f32
    %81 = vector.broadcast %cst_27 : f32 to vector<1x128xf32>
    %82 = arith.addf %78, %81 : vector<1x128xf32>
    %83 = math.rsqrt %82 : vector<1x128xf32>
    %84 = vector.broadcast %83 : vector<1x128xf32> to vector<8x128xf32>
    %85 = arith.mulf %80, %84 : vector<8x128xf32>
    %86 = vector.broadcast %64 : vector<1x128xf32> to vector<8x128xf32>
    %87 = arith.mulf %85, %86 : vector<8x128xf32>
    %88 = vector.broadcast %65 : vector<1x128xf32> to vector<8x128xf32>
    %89 = arith.addf %87, %88 : vector<8x128xf32>
    %c0_28 = arith.constant 0 : index
    %c0_29 = arith.constant 0 : index
    %90 = vector.load %arg2[%c0_28, %c0_29] : memref<8x128xf32, #tpu.memory_space<vmem>>, vector<8x128xf32>
    tpu.vector_store %arg2[%c0_28, %c0_29], %89 {strides = array<i32>} : memref<8x128xf32, #tpu.memory_space<vmem>>, vector<8x128xf32>,
    return
  }
}

</mosaic_0001>

<llo_original>
// kernel: tpu_custom_call.1
$region0: #{tpu_custom_call.1}
  #allocation0 [shape = 'u32[]', space=smem, size = 0x4, offset = 0x4, fixed_abs, tag = 'smem constant byte address 0x4 - core index']
  #allocation1 [shape = 'u32[72,128]{1,0:T(1,128)}', space=vmem, size = 0x9000, scoped, tag = 'internal scratch']
  %s0 = inlined_call_operand.hbm [shape: f32[8,25], index: 0, kind: input, shape index: {}]
  %s1 = inlined_call_operand.hbm [shape: f32[296,128], index: 1, kind: input, shape index: {}]
  %s2 = inlined_call_operand.hbm [shape: f32[8,128], index: 2, kind: output, shape index: {}]
  %s3 = sld [smem:[#allocation0]]
  $region26: #{tpu_custom_call.1} parent=0
    _
  %s5 = ssub.s32 1, %s3
  %s6 = scalar_select 0, %s5, %s3
  $region1: #{tpu_custom_call.1} parent=0
    #allocation2 [shape = 'u8[4096]{0}', space=vmem, size = 0x1000, scoped, tag = 'input window, operand 0, single buffered']
    #allocation3 [shape = 's32[1]{0}', space=sflag, size = 0x4, scoped, tag = 'scoped memory for tpu_custom_call.1']
    #allocation4 [shape = 's32[1]{0}', space=sflag, size = 0x4, scoped, tag = 'scoped memory for tpu_custom_call.1']
    #allocation5 [shape = 'u8[151552]{0}', space=vmem, size = 0x25000, scoped, tag = 'input window, operand 1, single buffered']
    #allocation6 [shape = 's32[1]{0}', space=sflag, size = 0x4, scoped, tag = 'scoped memory for tpu_custom_call.1']
    #allocation7 [shape = 'u8[4096]{0}', space=vmem, size = 0x1000, scoped, tag = 'output window, operand 0, single buffered']
    %7 = vsyncpa [#allocation3], 0
    %8 = vsyncpa [#allocation6], 0
    %9 = vsyncpa [#allocation4], 0
    // Predicated region
    $region2: #{tpu_custom_call.1} parent=1 // pred_check
      _
    $region3: #{tpu_custom_call.1} parent=1 // pred_check_branch
      %11 = sbr.rel (0) target = $region5
    $region4: #{tpu_custom_call.1} parent=1 // pred_region
      %13 = vsyncadd [#allocation3], 0
      %s15 = sshll.u32 %s0, 4
      %s16 = int_to_ptr.hbm [resolvable:$true] %s15
      %s17 = sshll.u32 [#allocation2], 4
      %s18 = int_to_ptr.vmem [resolvable:$true] %s17
      %20 = dma.hbm_to_vmem [thread:$0]  %s16, 128, %s18, [#allocation3]
    $region5: #{tpu_custom_call.1} parent=1 // pred_fallthru
      _
    // Predicated region
    $region6: #{tpu_custom_call.1} parent=1 // pred_check
      _
    $region7: #{tpu_custom_call.1} parent=1 // pred_check_branch
      %22 = sbr.rel (0) target = $region9
    $region8: #{tpu_custom_call.1} parent=1 // pred_region
      %24 = vsyncadd [#allocation6], 0
      %s25 = sshll.u32 %s1, 4
      %s26 = int_to_ptr.hbm [resolvable:$true] %s25
      %s27 = sshll.u32 [#allocation5], 4
      %s28 = int_to_ptr.vmem [resolvable:$true] %s27
      %33 = dma.hbm_to_vmem [thread:$0]  %s26, 4736, %s28, [#allocation6], 128, 128, 8
    $region9: #{tpu_custom_call.1} parent=1 // pred_fallthru
      _
    // Predicated region
    $region10: #{tpu_custom_call.1} parent=1 // pred_check
      _
    $region11: #{tpu_custom_call.1} parent=1 // pred_check_branch
      %35 = sbr.rel (0) target = $region13
    $region12: #{tpu_custom_call.1} parent=1 // pred_region
      %37 = dma.done [#allocation3], 128
    $region13: #{tpu_custom_call.1} parent=1 // pred_fallthru
      _
    // Predicated region
    $region14: #{tpu_custom_call.1} parent=1 // pred_check
      _
    $region15: #{tpu_custom_call.1} parent=1 // pred_check_branch
      %39 = sbr.rel (0) target = $region17
    $region16: #{tpu_custom_call.1} parent=1 // pred_region
      %41 = dma.done [#allocation6], 4736
    $region17: #{tpu_custom_call.1} parent=1 // pred_fallthru
      _
    %v42 = vld [vmem:[#allocation2] sm:$0xff]
    %v43 = vld [vmem:[#allocation5] sm:$0xff]
    %v44 = vld [vmem:[#allocation5 + $0x8] sm:$0xff]
    %v45 = vld [vmem:[#allocation5 + $0x10] sm:$0xff]
    %v46 = vld [vmem:[#allocation5 + $0x18] sm:$0x1]
    %v47 = vld [vmem:[#allocation5 + $0x20] sm:$0xff]
    %v48 = vld [vmem:[#allocation5 + $0x28] sm:$0xff]
    %v49 = vld [vmem:[#allocation5 + $0x30] sm:$0xff]
    %v50 = vld [vmem:[#allocation5 + $0x38] sm:$0xff]
    %v51 = vld [vmem:[#allocation5 + $0x40] sm:$0xff]
    %v52 = vld [vmem:[#allocation5 + $0x48] sm:$0xff]
    %v53 = vld [vmem:[#allocation5 + $0x50] sm:$0xff]
    %v54 = vld [vmem:[#allocation5 + $0x58] sm:$0xff]
    %v55 = vld [vmem:[#allocation5 + $0x60] sm:$0xff]
    %v56 = vld [vmem:[#allocation5 + $0x68] sm:$0xff]
    %v57 = vld [vmem:[#allocation5 + $0x70] sm:$0xff]
    %v58 = vld [vmem:[#allocation5 + $0x78] sm:$0xff]
    %v59 = vld [vmem:[#allocation5 + $0x80] sm:$0xff]
    %v60 = vld [vmem:[#allocation5 + $0x88] sm:$0xff]
    %v61 = vld [vmem:[#allocation5 + $0x90] sm:$0xff]
    %v62 = vld [vmem:[#allocation5 + $0x98] sm:$0xff]
    %v63 = vld [vmem:[#allocation5 + $0xa0] sm:$0xff]
    %v64 = vld [vmem:[#allocation5 + $0xa8] sm:$0xff]
    %v65 = vld [vmem:[#allocation5 + $0xb0] sm:$0xff]
    %v66 = vld [vmem:[#allocation5 + $0xb8] sm:$0xff]
    %v67 = vld [vmem:[#allocation5 + $0xc0] sm:$0xff]
    %v68 = vld [vmem:[#allocation5 + $0xc8] sm:$0xff]
    %v69 = vld [vmem:[#allocation5 + $0xd0] sm:$0xff]
    %v70 = vld [vmem:[#allocation5 + $0xd8] sm:$0xff]
    %v71 = vld [vmem:[#allocation5 + $0xe0] sm:$0xff]
    %v72 = vld [vmem:[#allocation5 + $0xe8] sm:$0xff]
    %v73 = vld [vmem:[#allocation5 + $0xf0] sm:$0xff]
    %v74 = vld [vmem:[#allocation5 + $0xf8] sm:$0xff]
    %v75 = vld [vmem:[#allocation5 + $0x100] sm:$0xff]
    %v76 = vld [vmem:[#allocation5 + $0x108] sm:$0xff]
    %v77 = vld [vmem:[#allocation5 + $0x110] sm:$0xff]
    %v78 = vld [vmem:[#allocation5 + $0x118] sm:$0xff]
    %v79 = vld [vmem:[#allocation5 + $0x120] sm:$0xff]
    %vm80 = vcmask 203776
    %v82 = vsel %vm80, %v42, 0
    %vm84 = vcmask 1040384
    %v86 = vsel %vm84, %v46, 0
    %88 = vmatpush.msra.mxu0 0.0
    %89 = vmatpush.msra.mxu0 0.0
    %90 = vmatpush.msra.mxu0 0.0
    %91 = vmatpush.msra.mxu0 0.0
    %92 = vmatpush.msra.mxu0 0.0
    %93 = vmatpush.msra.mxu0 0.0
    %94 = vmatpush.msra.mxu0 0.0
    %95 = vmatpush.msra.mxu0 0.0
    %96 = vmatpush.msra.mxu0 0.0
    %97 = vmatpush.msra.mxu0 0.0
    %98 = vmatpush.msra.mxu0 0.0
    %99 = vmatpush.msra.mxu0 0.0
    %100 = vmatpush.msra.mxu0 %v86
    %101 = vmatpush.msra.mxu0 %v45
    %102 = vmatpush.msra.mxu0 %v44
    %103 = vmatpush.msra.mxu0 %v43
    %104 = vmatmul.f32.gmra.mxu0 %v82
    %v105 = vpop.f32.mrf.mxu0
    %v106 = vadd.f32 0.0, %v105
    %107 = vdwg.mxu0
    %v108 = vrot.slane %v106, 4
    %v109 = vadd.f32 %v106, %v108
    %v110 = vrot.slane %v109, 2
    %v111 = vadd.f32 %v109, %v110
    %v112 = vrot.slane %v111, 1
    %v113 = vadd.f32 %v111, %v112
    %v114 = vmul.f32 %v106, %v106
    %v115 = vrot.slane %v114, 4
    %v116 = vadd.f32 %v114, %v115
    %v117 = vrot.slane %v116, 2
    %v118 = vadd.f32 %v116, %v117
    %v119 = vrot.slane %v118, 1
    %v120 = vadd.f32 %v118, %v119
    %v121 = vmul.f32 %v113, 0.125
    %v122 = vmul.f32 %v120, 0.125
    %v123 = vmul.f32 %v121, %v121
    %v124 = vsub.f32 %v122, %v123
    %v125 = vmax.f32 %v124, 0.0
    %v126 = vsub.f32 %v106, %v121
    %v127 = vadd.f32 %v125, 1e-05
    %v128 = vrsqrt.pop %v127
    %v129 = vmul.f32 %v128, %v127
    %v130 = vmul.f32 %v129, %v128
    %v131 = vmul.f32 0.5, %v130
    %v132 = vsub.f32 1.5, %v131
    %v133 = vmul.f32 %v128, %v132
    %vm134 = vweird.f32 %v127
    %vm135 = vweird.f32 %v128
    %vm136 = vmor %vm134, %vm135
    %v137 = vsel %vm136, %v128, %v133
    %v138 = vmul.f32 %v126, %v137
    %v139 = vperm.slane %v79, 0
    %v140 = vmul.f32 %v138, %v139
    %v141 = vperm.slane %v79, 1
    %v142 = vadd.f32 %v140, %v141
    %v143 = vmax.f32 %v142, 0.0
    %144 = vmatpush.msra.mxu0 %v62
    %145 = vmatpush.msra.mxu0 %v61
    %146 = vmatpush.msra.mxu0 %v60
    %147 = vmatpush.msra.mxu0 %v59
    %148 = vmatpush.msra.mxu0 %v58
    %149 = vmatpush.msra.mxu0 %v57
    %150 = vmatpush.msra.mxu0 %v56
    %151 = vmatpush.msra.mxu0 %v55
    %152 = vmatpush.msra.mxu0 %v54
    %153 = vmatpush.msra.mxu0 %v53
    %154 = vmatpush.msra.mxu0 %v52
    %155 = vmatpush.msra.mxu0 %v51
    %156 = vmatpush.msra.mxu0 %v50
    %157 = vmatpush.msra.mxu0 %v49
    %158 = vmatpush.msra.mxu0 %v48
    %159 = vmatpush.msra.mxu0 %v47
    %160 = vmatmul.f32.gmra.mxu0 %v143
    %v161 = vpop.f32.mrf.mxu0
    %v162 = vadd.f32 0.0, %v161
    %163 = vdwg.mxu0
    %v164 = vrot.slane %v162, 4
    %v165 = vadd.f32 %v162, %v164
    %v166 = vrot.slane %v165, 2
    %v167 = vadd.f32 %v165, %v166
    %v168 = vrot.slane %v167, 1
    %v169 = vadd.f32 %v167, %v168
    %v170 = vmul.f32 %v162, %v162
    %v171 = vrot.slane %v170, 4
    %v172 = vadd.f32 %v170, %v171
    %v173 = vrot.slane %v172, 2
    %v174 = vadd.f32 %v172, %v173
    %v175 = vrot.slane %v174, 1
    %v176 = vadd.f32 %v174, %v175
    %v177 = vmul.f32 %v169, 0.125
    %v178 = vmul.f32 %v176, 0.125
    %v179 = vmul.f32 %v177, %v177
    %v180 = vsub.f32 %v178, %v179
    %v181 = vmax.f32 %v180, 0.0
    %v182 = vsub.f32 %v162, %v177
    %v183 = vadd.f32 %v181, 1e-05
    %v184 = vrsqrt.pop %v183
    %v185 = vmul.f32 %v184, %v183
    %v186 = vmul.f32 %v185, %v184
    %v187 = vmul.f32 0.5, %v186
    %v188 = vsub.f32 1.5, %v187
    %v189 = vmul.f32 %v184, %v188
    %vm190 = vweird.f32 %v183
    %vm191 = vweird.f32 %v184
    %vm192 = vmor %vm190, %vm191
    %v193 = vsel %vm192, %v184, %v189
    %v194 = vmul.f32 %v182, %v193
    %v195 = vperm.slane %v79, 2
    %v196 = vmul.f32 %v194, %v195
    %v197 = vperm.slane %v79, 3
    %v198 = vadd.f32 %v196, %v197
    %v199 = vmax.f32 %v198, 0.0
    %200 = vmatpush.msra.mxu0 %v78
    %201 = vmatpush.msra.mxu0 %v77
    %202 = vmatpush.msra.mxu0 %v76
    %203 = vmatpush.msra.mxu0 %v75
    %204 = vmatpush.msra.mxu0 %v74
    %205 = vmatpush.msra.mxu0 %v73
    %206 = vmatpush.msra.mxu0 %v72
    %207 = vmatpush.msra.mxu0 %v71
    %208 = vmatpush.msra.mxu0 %v70
    %209 = vmatpush.msra.mxu0 %v69
    %210 = vmatpush.msra.mxu0 %v68
    %211 = vmatpush.msra.mxu0 %v67
    %212 = vmatpush.msra.mxu0 %v66
    %213 = vmatpush.msra.mxu0 %v65
    %214 = vmatpush.msra.mxu0 %v64
    %215 = vmatpush.msra.mxu0 %v63
    %216 = vmatmul.f32.gmra.mxu0 %v199
    %v217 = vpop.f32.mrf.mxu0
    %v218 = vadd.f32 0.0, %v217
    %219 = vdwg.mxu0
    %v220 = vrot.slane %v218, 4
    %v221 = vadd.f32 %v218, %v220
    %v222 = vrot.slane %v221, 2
    %v223 = vadd.f32 %v221, %v222
    %v224 = vrot.slane %v223, 1
    %v225 = vadd.f32 %v223, %v224
    %v226 = vmul.f32 %v218, %v218
    %v227 = vrot.slane %v226, 4
    %v228 = vadd.f32 %v226, %v227
    %v229 = vrot.slane %v228, 2
    %v230 = vadd.f32 %v228, %v229
    %v231 = vrot.slane %v230, 1
    %v232 = vadd.f32 %v230, %v231
    %v233 = vmul.f32 %v225, 0.125
    %v234 = vmul.f32 %v232, 0.125
    %v235 = vmul.f32 %v233, %v233
    %v236 = vsub.f32 %v234, %v235
    %v237 = vmax.f32 %v236, 0.0
    %v238 = vsub.f32 %v218, %v233
    %v239 = vadd.f32 %v237, 1e-05
    %v240 = vrsqrt.pop %v239
    %v241 = vmul.f32 %v240, %v239
    %v242 = vmul.f32 %v241, %v240
    %v243 = vmul.f32 0.5, %v242
    %v244 = vsub.f32 1.5, %v243
    %v245 = vmul.f32 %v240, %v244
    %vm246 = vweird.f32 %v239
    %vm247 = vweird.f32 %v240
    %vm248 = vmor %vm246, %vm247
    %v249 = vsel %vm248, %v240, %v245
    %v250 = vmul.f32 %v238, %v249
    %v251 = vperm.slane %v79, 4
    %v252 = vmul.f32 %v250, %v251
    %v253 = vperm.slane %v79, 5
    %v254 = vadd.f32 %v252, %v253
    %255 = vst [vmem:[#allocation7] sm:$0xff] %v254
    // Predicated region
    $region18: #{tpu_custom_call.1} parent=1 // pred_check
      _
    $region19: #{tpu_custom_call.1} parent=1 // pred_check_branch
      %257 = sbr.rel (0) target = $region21
    $region20: #{tpu_custom_call.1} parent=1 // pred_region
      %259 = vsyncadd [#allocation4], 0
      %s261 = sshll.u32 [#allocation7], 4
      %s262 = int_to_ptr.vmem [resolvable:$true] %s261
      %s263 = sshll.u32 %s2, 4
      %s264 = int_to_ptr.hbm [resolvable:$true] %s263
      %266 = dma.vmem_to_hbm [thread:$0]  %s262, 128, %s264, [#allocation4]
    $region21: #{tpu_custom_call.1} parent=1 // pred_fallthru
      _
    // Predicated region
    $region22: #{tpu_custom_call.1} parent=1 // pred_check
      _
    $region23: #{tpu_custom_call.1} parent=1 // pred_check_branch
      %268 = sbr.rel (0) target = $region25
    $region24: #{tpu_custom_call.1} parent=1 // pred_region
      %270 = dma.done [#allocation4], 128
    $region25: #{tpu_custom_call.1} parent=1 // pred_fallthru
      _
    %271 = vsyncpa [#allocation3], 1
    %272 = vsyncpa [#allocation6], 1
    %273 = vsyncpa [#allocation4], 1

</llo_original>
